<compile_context>
chip_gen: v7x
topology: tpu7x:2x2x1
jax: 0.10.0
libtpu: 0.0.40
codegen_flags: <defaults>
</compile_context>

<pallas_src>
import functools

import jax
import jax.numpy as jnp
from jax.experimental import pallas as pl
from jax.experimental.pallas import tpu as pltpu


def _round_up(v, m):
    return (v + m - 1) // m * m


def _param_layout(C, F, L, n_conv):
    """Static row offsets of each section inside the single packed param slab."""
    in_dims = [C] + [F] * (n_conv - 1)
    conv_w_rows = []
    row = 0
    for d in in_dims:
        conv_w_rows.append(row)
        row += _round_up(d, 8)          # keep every section start 8-aligned
    conv_b_row = row
    row += _round_up(n_conv, 8)
    fc1_row = row
    row += L * F                        # L*F is a multiple of 8 here
    misc_row = row
    row += 8
    return dict(in_dims=in_dims, conv_w_rows=conv_w_rows, conv_b_row=conv_b_row,
                fc1_row=fc1_row, misc_row=misc_row, total_rows=row)


def cnn_kernel(x_ref, p_ref, out_ref, wide_ref, *, F, n_conv):
    """Whole forward pass for one batch tile; everything resident in VMEM.

    x_ref:    (tb, L, C)      activations for this batch tile
    p_ref:    (rows, 128)     single packed parameter slab (resident across grid)
    out_ref:  (tb, 1)
    wide_ref: (tb, L*F)       VMEM scratch used to relayout conv output for fc1
    """
    tb, L, C = x_ref.shape
    lay = _param_layout(C, F, L, n_conv)

    # --- 1x1 Conv1d + ReLU stack == position-wise linear layers; fold (batch,
    # time) into M so each layer is a single 2D MXU matmul. -------------------
    h = x_ref[...].reshape(tb * L, C)                 # leading-dim merge (free)
    bias_blk = p_ref[lay['conv_b_row']:lay['conv_b_row'] + 8, :F]
    for i, d in enumerate(lay['in_dims']):
        r0 = lay['conv_w_rows'][i]
        w = p_ref[r0:r0 + d, :F]                      # (d, F)
        b = bias_blk[i:i + 1, :]                      # (1, F)
        h = jnp.maximum(
            jnp.dot(h, w, preferred_element_type=jnp.float32) + b, 0.0)
    # h: (tb*L, F)

    # --- fc1 fused into ONE K=L*F matmul. Relayout (tb*L, F) -> (tb, L*F) via
    # a VMEM scratch: one static column-slice store per timestep (no per-l dot
    # chain, no serial accumulate dependency). --------------------------------
    h3 = h.reshape(tb, L, F)                          # leading-dim split (free)
    for l in range(L):
        wide_ref[:, l * F:(l + 1) * F] = h3[:, l, :]

    wfc1 = p_ref[lay['fc1_row']:lay['fc1_row'] + L * F, :]          # (L*F, 128)
    acc = jnp.dot(wide_ref[...], wfc1, preferred_element_type=jnp.float32)

    misc = p_ref[lay['misc_row']:lay['misc_row'] + 8, :]
    bfc1 = misc[0:1, :]                               # fc1 bias (zero-padded)
    wfc2 = misc[1:2, :]                               # fc2 weight row (zero-padded)
    bfc2 = misc[2:3, 0:1]                             # fc2 bias

    f1 = jnp.maximum(acc + bfc1, 0.0)                 # (tb, 128), lane-dense
    # TODO(synk): nn.Dropout(p=0.2) is identity at inference; train-mode dropout not implemented.

    # fc2 (output dim 1): lane reduction on the XLU instead of an N=1 matmul.
    out_ref[...] = jnp.sum(f1 * wfc2, axis=-1, keepdims=True) + bfc2


def prepare_params(conv_ws, conv_bs, fc1_w, fc1_b, fc2_w, fc2_b, h_pad=128):
    """Pack all PyTorch-layout parameters into ONE slab. Call once at load time."""
    F, C = conv_ws[0].shape                 # (out, in) of first 1x1 conv
    n_conv = len(conv_ws)
    H = fc1_w.shape[0]                      # 100
    L = fc1_w.shape[1] // F                 # seq_length
    Hp = max(h_pad, F)                      # lane width of the slab (128)
    lay = _param_layout(C, F, L, n_conv)

    slab = jnp.zeros((lay['total_rows'], Hp), jnp.float32)
    for i, (w, d) in enumerate(zip(conv_ws, lay['in_dims'])):
        r0 = lay['conv_w_rows'][i]
        slab = slab.at[r0:r0 + d, :F].set(jnp.asarray(w, jnp.float32).T)
    for i, b in enumerate(conv_bs):
        slab = slab.at[lay['conv_b_row'] + i, :F].set(jnp.asarray(b, jnp.float32))

    # PyTorch Flatten of the (B, F, L) conv output indexes features as f*L + l;
    # the kernel's wide activation uses l*F + f, so reorder the fc1 weight and
    # zero-pad H -> Hp (padded lanes contribute 0 through ReLU / lane reduce).
    w_big = (jnp.asarray(fc1_w, jnp.float32)
             .reshape(H, F, L).transpose(2, 1, 0).reshape(L * F, H))
    w_big = jnp.pad(w_big, ((0, 0), (0, Hp - H)))
    slab = slab.at[lay['fc1_row']:lay['fc1_row'] + L * F, :].set(w_big)

    slab = slab.at[lay['misc_row'], :H].set(jnp.asarray(fc1_b, jnp.float32))
    slab = slab.at[lay['misc_row'] + 1, :H].set(jnp.asarray(fc2_w, jnp.float32)[0])
    slab = slab.at[lay['misc_row'] + 2, 0].set(jnp.asarray(fc2_b, jnp.float32)[0])
    return slab


@functools.partial(jax.jit, static_argnames=("filters", "n_conv", "tile_b"))
def cnn_forward(x, params, *, filters=64, n_conv=3, tile_b=256):
    """Batch-tiled forward: weights stay resident in VMEM across grid steps."""
    B, L, C = x.shape
    F = filters
    if B <= tile_b:
        tb, Bp = B, B
    else:
        assert tile_b % 8 == 0, "batch tile must be a multiple of 8"
        tb = tile_b
        Bp = _round_up(B, tb)
    if Bp != B:
        x = jnp.pad(x, ((0, Bp - B), (0, 0), (0, 0)))
    grid = (Bp // tb,)

    kernel = functools.partial(cnn_kernel, F=F, n_conv=n_conv)
    out = pl.pallas_call(
        kernel,
        out_shape=jax.ShapeDtypeStruct((Bp, 1), jnp.float32),
        grid_spec=pltpu.PrefetchScalarGridSpec(
            num_scalar_prefetch=0,
            grid=grid,
            in_specs=[
                pl.BlockSpec((tb, L, C), lambda i: (i, 0, 0)),
                # Single packed weight slab; constant index -> resident in VMEM.
                pl.BlockSpec(params.shape, lambda i: (0, 0)),
            ],
            out_specs=pl.BlockSpec((tb, 1), lambda i: (i, 0)),
            scratch_shapes=[pltpu.VMEM((tb, L * F), jnp.float32)],
        ),
        compiler_params=pltpu.CompilerParams(
            dimension_semantics=("parallel",)),
    )(x, params)
    return out[:B]


def ref_forward(x, conv_ws, conv_bs, fc1_w, fc1_b, fc2_w, fc2_b):
    """Pure-JAX reference mirroring the PyTorch forward exactly."""
    h = jnp.transpose(x, (0, 2, 1))                         # (B, C, L)
    for w, b in zip(conv_ws, conv_bs):
        h = jnp.maximum(jnp.einsum('fc,bcl->bfl', w, h) + b[None, :, None], 0.0)
    feat = h.reshape(h.shape[0], -1)                        # PyTorch Flatten: f*L + l
    f1 = jnp.maximum(feat @ fc1_w.T + fc1_b, 0.0)
    return f1 @ fc2_w.T + fc2_b


if __name__ == "__main__":
    # Shapes consistent with the module: input_size=4, seq_length=8,
    # filters=64, num_layers=3, kernel_size=1, output_size=1.
    B, L, C, F, H = 2, 8, 4, 64, 100

    key = jax.random.PRNGKey(0)
    ks = jax.random.split(key, 11)
    x = jax.random.normal(ks[0], (B, L, C), jnp.float32)

    conv_ws = [
        jax.random.normal(ks[1], (F, C), jnp.float32) * 0.1,
        jax.random.normal(ks[2], (F, F), jnp.float32) * 0.1,
        jax.random.normal(ks[3], (F, F), jnp.float32) * 0.1,
    ]
    conv_bs = [
        jax.random.normal(ks[4], (F,), jnp.float32) * 0.1,
        jax.random.normal(ks[5], (F,), jnp.float32) * 0.1,
        jax.random.normal(ks[6], (F,), jnp.float32) * 0.1,
    ]
    fc1_w = jax.random.normal(ks[7], (H, F * L), jnp.float32) * 0.05
    fc1_b = jax.random.normal(ks[8], (H,), jnp.float32) * 0.05
    fc2_w = jax.random.normal(ks[9], (1, H), jnp.float32) * 0.05
    fc2_b = jax.random.normal(ks[10], (1,), jnp.float32) * 0.05

    # One-time parameter packing (hoisted out of the inference path).
    params = jax.block_until_ready(
        prepare_params(conv_ws, conv_bs, fc1_w, fc1_b, fc2_w, fc2_b))

    # Small batch (grid of 1).
    out = jax.block_until_ready(cnn_forward(x, params))
    ref = ref_forward(x, conv_ws, conv_bs, fc1_w, fc1_b, fc2_w, fc2_b)
    assert out.shape == (B, 1), out.shape
    assert jnp.allclose(out, ref, atol=1e-4, rtol=1e-4), (out, ref)

    # Larger batch exercising the multi-step grid with resident weights.
    Bbig = 32
    xb = jax.random.normal(ks[0], (Bbig, L, C), jnp.float32)
    outb = jax.block_until_ready(cnn_forward(xb, params, tile_b=8))
    refb = ref_forward(xb, conv_ws, conv_bs, fc1_w, fc1_b, fc2_w, fc2_b)
    assert outb.shape == (Bbig, 1), outb.shape
    assert jnp.allclose(outb, refb, atol=1e-4, rtol=1e-4)

    print("KERNEL_OK")
</pallas_src>

<mosaic_0001>
module attributes {stable_mosaic.version = 11 : i64} {
  func.func @cnn_kernel(%arg0: i32, %arg1: memref<2x8x4xf32, #tpu.memory_space<vmem>>, %arg2: memref<664x128xf32, #tpu.memory_space<vmem>>, %arg3: memref<2x1xf32, #tpu.memory_space<vmem>>, %arg4: memref<2x512xf32, #tpu.memory_space<vmem>>) attributes {dimension_semantics = [#tpu.dimension_semantics<parallel>], iteration_bounds = array<i64: 1>, scalar_prefetch = 0 : i64, scratch_operands = 1 : i64, tpu.core_type = #tpu.core_type<tc>, window_params = [{transform_indices = @transform_0, window_bounds = array<i64: 2, 8, 4>}, {pipeline_mode = #tpu.pipeline_mode<synchronous>, transform_indices = @transform_1, window_bounds = array<i64: 664, 128>}, {transform_indices = @transform_2, window_bounds = array<i64: 2, 1>}]} {
    %c0 = arith.constant 0 : index
    %c0_0 = arith.constant 0 : index
    %c0_1 = arith.constant 0 : index
    %0 = vector.load %arg1[%c0, %c0_0, %c0_1] : memref<2x8x4xf32, #tpu.memory_space<vmem>>, vector<2x8x4xf32>
    %1 = vector.shape_cast %0 : vector<2x8x4xf32> to vector<16x4xf32>
    %c136 = arith.constant 136 : index
    %c0_2 = arith.constant 0 : index
    %2 = vector.load %arg2[%c136, %c0_2] : memref<664x128xf32, #tpu.memory_space<vmem>>, vector<8x64xf32>
    %c0_3 = arith.constant 0 : index
    %c0_4 = arith.constant 0 : index
    %3 = vector.load %arg2[%c0_3, %c0_4] : memref<664x128xf32, #tpu.memory_space<vmem>>, vector<4x64xf32>
    %4 = vector.extract_strided_slice %2 {offsets = [0, 0], sizes = [1, 64], strides = [1, 1]} : vector<8x64xf32> to vector<1x64xf32>
    %cst = arith.constant dense<0.000000e+00> : vector<16x64xf32>
    %5 = tpu.matmul %1, %3, %cst {dimension_numbers = #tpu.dot_dimension_numbers<[1], [0], [0], [1], [0, 0, 1, 1], [], []>} : vector<16x4xf32>, vector<4x64xf32>, vector<16x64xf32> -> vector<16x64xf32>
    %6 = vector.broadcast %4 : vector<1x64xf32> to vector<16x64xf32>
    %7 = arith.addf %5, %6 : vector<16x64xf32>
    %cst_5 = arith.constant 0.000000e+00 : f32
    %8 = vector.broadcast %cst_5 : f32 to vector<16x64xf32>
    %9 = arith.maximumf %7, %8 : vector<16x64xf32>
    %c8 = arith.constant 8 : index
    %c0_6 = arith.constant 0 : index
    %10 = vector.load %arg2[%c8, %c0_6] : memref<664x128xf32, #tpu.memory_space<vmem>>, vector<64x64xf32>
    %11 = vector.extract_strided_slice %2 {offsets = [1, 0], sizes = [1, 64], strides = [1, 1]} : vector<8x64xf32> to vector<1x64xf32>
    %cst_7 = arith.constant dense<0.000000e+00> : vector<16x64xf32>
    %12 = tpu.matmul %9, %10, %cst_7 {dimension_numbers = #tpu.dot_dimension_numbers<[1], [0], [0], [1], [0, 0, 1, 1], [], []>} : vector<16x64xf32>, vector<64x64xf32>, vector<16x64xf32> -> vector<16x64xf32>
    %13 = vector.broadcast %11 : vector<1x64xf32> to vector<16x64xf32>
    %14 = arith.addf %12, %13 : vector<16x64xf32>
    %cst_8 = arith.constant 0.000000e+00 : f32
    %15 = vector.broadcast %cst_8 : f32 to vector<16x64xf32>
    %16 = arith.maximumf %14, %15 : vector<16x64xf32>
    %c72 = arith.constant 72 : index
    %c0_9 = arith.constant 0 : index
    %17 = vector.load %arg2[%c72, %c0_9] : memref<664x128xf32, #tpu.memory_space<vmem>>, vector<64x64xf32>
    %18 = vector.extract_strided_slice %2 {offsets = [2, 0], sizes = [1, 64], strides = [1, 1]} : vector<8x64xf32> to vector<1x64xf32>
    %cst_10 = arith.constant dense<0.000000e+00> : vector<16x64xf32>
    %19 = tpu.matmul %16, %17, %cst_10 {dimension_numbers = #tpu.dot_dimension_numbers<[1], [0], [0], [1], [0, 0, 1, 1], [], []>} : vector<16x64xf32>, vector<64x64xf32>, vector<16x64xf32> -> vector<16x64xf32>
    %20 = vector.broadcast %18 : vector<1x64xf32> to vector<16x64xf32>
    %21 = arith.addf %19, %20 : vector<16x64xf32>
    %cst_11 = arith.constant 0.000000e+00 : f32
    %22 = vector.broadcast %cst_11 : f32 to vector<16x64xf32>
    %23 = arith.maximumf %21, %22 : vector<16x64xf32>
    %24 = vector.shape_cast %23 : vector<16x64xf32> to vector<2x8x64xf32>
    %25 = vector.extract_strided_slice %24 {offsets = [0, 0, 0], sizes = [2, 1, 64], strides = [1, 1, 1]} : vector<2x8x64xf32> to vector<2x1x64xf32>
    %26 = vector.shape_cast %25 : vector<2x1x64xf32> to vector<2x64xf32>
    %c0_12 = arith.constant 0 : index
    %c0_13 = arith.constant 0 : index
    %27 = vector.load %arg4[%c0_12, %c0_13] : memref<2x512xf32, #tpu.memory_space<vmem>>, vector<2x64xf32>
    tpu.vector_store %arg4[%c0_12, %c0_13], %26 {strides = array<i32>} : memref<2x512xf32, #tpu.memory_space<vmem>>, vector<2x64xf32>,
    %28 = vector.extract_strided_slice %24 {offsets = [0, 1, 0], sizes = [2, 1, 64], strides = [1, 1, 1]} : vector<2x8x64xf32> to vector<2x1x64xf32>
    %29 = vector.shape_cast %28 : vector<2x1x64xf32> to vector<2x64xf32>
    %c0_14 = arith.constant 0 : index
    %c64 = arith.constant 64 : index
    %30 = vector.load %arg4[%c0_14, %c64] : memref<2x512xf32, #tpu.memory_space<vmem>>, vector<2x64xf32>
    tpu.vector_store %arg4[%c0_14, %c64], %29 {strides = array<i32>} : memref<2x512xf32, #tpu.memory_space<vmem>>, vector<2x64xf32>,
    %31 = vector.extract_strided_slice %24 {offsets = [0, 2, 0], sizes = [2, 1, 64], strides = [1, 1, 1]} : vector<2x8x64xf32> to vector<2x1x64xf32>
    %32 = vector.shape_cast %31 : vector<2x1x64xf32> to vector<2x64xf32>
    %c0_15 = arith.constant 0 : index
    %c128 = arith.constant 128 : index
    %33 = vector.load %arg4[%c0_15, %c128] : memref<2x512xf32, #tpu.memory_space<vmem>>, vector<2x64xf32>
    tpu.vector_store %arg4[%c0_15, %c128], %32 {strides = array<i32>} : memref<2x512xf32, #tpu.memory_space<vmem>>, vector<2x64xf32>,
    %34 = vector.extract_strided_slice %24 {offsets = [0, 3, 0], sizes = [2, 1, 64], strides = [1, 1, 1]} : vector<2x8x64xf32> to vector<2x1x64xf32>
    %35 = vector.shape_cast %34 : vector<2x1x64xf32> to vector<2x64xf32>
    %c0_16 = arith.constant 0 : index
    %c192 = arith.constant 192 : index
    %36 = vector.load %arg4[%c0_16, %c192] : memref<2x512xf32, #tpu.memory_space<vmem>>, vector<2x64xf32>
    tpu.vector_store %arg4[%c0_16, %c192], %35 {strides = array<i32>} : memref<2x512xf32, #tpu.memory_space<vmem>>, vector<2x64xf32>,
    %37 = vector.extract_strided_slice %24 {offsets = [0, 4, 0], sizes = [2, 1, 64], strides = [1, 1, 1]} : vector<2x8x64xf32> to vector<2x1x64xf32>
    %38 = vector.shape_cast %37 : vector<2x1x64xf32> to vector<2x64xf32>
    %c0_17 = arith.constant 0 : index
    %c256 = arith.constant 256 : index
    %39 = vector.load %arg4[%c0_17, %c256] : memref<2x512xf32, #tpu.memory_space<vmem>>, vector<2x64xf32>
    tpu.vector_store %arg4[%c0_17, %c256], %38 {strides = array<i32>} : memref<2x512xf32, #tpu.memory_space<vmem>>, vector<2x64xf32>,
    %40 = vector.extract_strided_slice %24 {offsets = [0, 5, 0], sizes = [2, 1, 64], strides = [1, 1, 1]} : vector<2x8x64xf32> to vector<2x1x64xf32>
    %41 = vector.shape_cast %40 : vector<2x1x64xf32> to vector<2x64xf32>
    %c0_18 = arith.constant 0 : index
    %c320 = arith.constant 320 : index
    %42 = vector.load %arg4[%c0_18, %c320] : memref<2x512xf32, #tpu.memory_space<vmem>>, vector<2x64xf32>
    tpu.vector_store %arg4[%c0_18, %c320], %41 {strides = array<i32>} : memref<2x512xf32, #tpu.memory_space<vmem>>, vector<2x64xf32>,
    %43 = vector.extract_strided_slice %24 {offsets = [0, 6, 0], sizes = [2, 1, 64], strides = [1, 1, 1]} : vector<2x8x64xf32> to vector<2x1x64xf32>
    %44 = vector.shape_cast %43 : vector<2x1x64xf32> to vector<2x64xf32>
    %c0_19 = arith.constant 0 : index
    %c384 = arith.constant 384 : index
    %45 = vector.load %arg4[%c0_19, %c384] : memref<2x512xf32, #tpu.memory_space<vmem>>, vector<2x64xf32>
    tpu.vector_store %arg4[%c0_19, %c384], %44 {strides = array<i32>} : memref<2x512xf32, #tpu.memory_space<vmem>>, vector<2x64xf32>,
    %46 = vector.extract_strided_slice %24 {offsets = [0, 7, 0], sizes = [2, 1, 64], strides = [1, 1, 1]} : vector<2x8x64xf32> to vector<2x1x64xf32>
    %47 = vector.shape_cast %46 : vector<2x1x64xf32> to vector<2x64xf32>
    %c0_20 = arith.constant 0 : index
    %c448 = arith.constant 448 : index
    %48 = vector.load %arg4[%c0_20, %c448] : memref<2x512xf32, #tpu.memory_space<vmem>>, vector<2x64xf32>
    tpu.vector_store %arg4[%c0_20, %c448], %47 {strides = array<i32>} : memref<2x512xf32, #tpu.memory_space<vmem>>, vector<2x64xf32>,
    %c144 = arith.constant 144 : index
    %c0_21 = arith.constant 0 : index
    %49 = vector.load %arg2[%c144, %c0_21] : memref<664x128xf32, #tpu.memory_space<vmem>>, vector<512x128xf32>
    %c0_22 = arith.constant 0 : index
    %c0_23 = arith.constant 0 : index
    %50 = vector.load %arg4[%c0_22, %c0_23] : memref<2x512xf32, #tpu.memory_space<vmem>>, vector<2x512xf32>
    %cst_24 = arith.constant dense<0.000000e+00> : vector<2x128xf32>
    %51 = tpu.matmul %50, %49, %cst_24 {dimension_numbers = #tpu.dot_dimension_numbers<[1], [0], [0], [1], [0, 0, 1, 1], [], []>} : vector<2x512xf32>, vector<512x128xf32>, vector<2x128xf32> -> vector<2x128xf32>
    %c656 = arith.constant 656 : index
    %c0_25 = arith.constant 0 : index
    %52 = vector.load %arg2[%c656, %c0_25] : memref<664x128xf32, #tpu.memory_space<vmem>>, vector<8x128xf32>
    %53 = vector.extract_strided_slice %52 {offsets = [0, 0], sizes = [1, 128], strides = [1, 1]} : vector<8x128xf32> to vector<1x128xf32>
    %54 = vector.extract_strided_slice %52 {offsets = [1, 0], sizes = [1, 128], strides = [1, 1]} : vector<8x128xf32> to vector<1x128xf32>
    %55 = vector.extract_strided_slice %52 {offsets = [2, 0], sizes = [1, 1], strides = [1, 1]} : vector<8x128xf32> to vector<1x1xf32>
    %56 = vector.broadcast %53 : vector<1x128xf32> to vector<2x128xf32>
    %57 = arith.addf %51, %56 : vector<2x128xf32>
    %cst_26 = arith.constant 0.000000e+00 : f32
    %58 = vector.broadcast %cst_26 : f32 to vector<2x128xf32>
    %59 = arith.maximumf %57, %58 : vector<2x128xf32>
    %60 = vector.broadcast %54 : vector<1x128xf32> to vector<2x128xf32>
    %61 = arith.mulf %59, %60 : vector<2x128xf32>
    %cst_27 = arith.constant dense<0.000000e+00> : vector<2xf32>
    %62 = vector.multi_reduction <add>, %61, %cst_27 [1] : vector<2x128xf32> to vector<2xf32>
    %63 = vector.shape_cast %62 : vector<2xf32> to vector<2x1xf32>
    %64 = vector.broadcast %55 : vector<1x1xf32> to vector<2x1xf32>
    %65 = arith.addf %63, %64 : vector<2x1xf32>
    %c0_28 = arith.constant 0 : index
    %c0_29 = arith.constant 0 : index
    %66 = vector.load %arg3[%c0_28, %c0_29] : memref<2x1xf32, #tpu.memory_space<vmem>>, vector<2x1xf32>
    tpu.vector_store %arg3[%c0_28, %c0_29], %65 {strides = array<i32>} : memref<2x1xf32, #tpu.memory_space<vmem>>, vector<2x1xf32>,
    return
  }
  func.func @transform_0(%arg0: i32) -> (i32, i32, i32) {
    %c0_i32 = arith.constant 0 : i32
    %c0_i32_0 = arith.constant 0 : i32
    %c0_i32_1 = arith.constant 0 : i32
    return %arg0, %c0_i32, %c0_i32_0 : i32, i32, i32
  }
  func.func @transform_1(%arg0: i32) -> (i32, i32) {
    %c0_i32 = arith.constant 0 : i32
    %c0_i32_0 = arith.constant 0 : i32
    %c0_i32_1 = arith.constant 0 : i32
    return %c0_i32, %c0_i32_0 : i32, i32
  }
  func.func @transform_2(%arg0: i32) -> (i32, i32) {
    %c0_i32 = arith.constant 0 : i32
    %c0_i32_0 = arith.constant 0 : i32
    return %arg0, %c0_i32 : i32, i32
  }
}

</mosaic_0001>

<llo_original>
// kernel: cnn_forward.1
$region0: #{cnn_forward.1}
  #allocation0 [shape = 'u32[]', space=smem, size = 0x4, offset = 0x4, fixed_abs, tag = 'smem constant byte address 0x4 - core index']
  #allocation1 [shape = 'u32[144,128]{1,0:T(1,128)}', space=vmem, size = 0x12000, scoped, tag = 'internal scratch']
  #allocation2 [shape = 'f32[2,512]{1,0:T(2,128)}', space=vmem, size = 0x1000, scoped, tag = 'scratch operand']
  %s0 = inlined_call_operand.vmem [shape: f32[2,8,4], index: 0, kind: input, shape index: {}]
  %s1 = inlined_call_operand.hbm [shape: f32[664,128], index: 1, kind: input, shape index: {}]
  %s2 = inlined_call_operand.vmem [shape: f32[2,1], index: 2, kind: output, shape index: {}]
  %s3 = sld [smem:[#allocation0]]
  $region22: #{cnn_forward.1} parent=0
    _
  %s5 = ssub.s32 1, %s3
  %s6 = scalar_select 0, %s5, %s3
  $region1: #{cnn_forward.1} parent=0
    #allocation3 [shape = 'u8[339968]{0}', space=vmem, size = 0x53000, scoped, tag = 'input window, operand 1, single buffered']
    #allocation4 [shape = 's32[1]{0}', space=sflag, size = 0x4, scoped, tag = 'scoped memory for cnn_forward.1']
    %7 = vsyncpa [#allocation4], 0
    // Predicated region
    $region2: #{cnn_forward.1} parent=1 // pred_check
      _
    $region3: #{cnn_forward.1} parent=1 // pred_check_branch
      %9 = sbr.rel (0) target = $region5
    $region4: #{cnn_forward.1} parent=1 // pred_region
      _
    $region5: #{cnn_forward.1} parent=1 // pred_fallthru
      _
    // Predicated region
    $region6: #{cnn_forward.1} parent=1 // pred_check
      _
    $region7: #{cnn_forward.1} parent=1 // pred_check_branch
      %11 = sbr.rel (0) target = $region9
    $region8: #{cnn_forward.1} parent=1 // pred_region
      %s13 = ssub.s32 10624, 10624
      %14 = vsyncadd [#allocation4], %s13
      %s15 = sshll.u32 [#allocation3], 4
      %s16 = int_to_ptr.vmem [resolvable:$true] %s15
      %21 = dma.hbm_to_vmem [thread:$0]  %s1, 10624, %s16, [#allocation4], 128, 128, 8
    $region9: #{cnn_forward.1} parent=1 // pred_fallthru
      _
    // Predicated region
    $region10: #{cnn_forward.1} parent=1 // pred_check
      _
    $region11: #{cnn_forward.1} parent=1 // pred_check_branch
      %23 = sbr.rel (0) target = $region13
    $region12: #{cnn_forward.1} parent=1 // pred_region
      %24 = dma.done [#allocation4], 10624
    $region13: #{cnn_forward.1} parent=1 // pred_fallthru
      _
    %v25 = vld [vmem:[%s0] sm:$0xff]
    %v26 = vld [vmem:[%s0 + $0x8] sm:$0xff]
    %v27 = vld [vmem:[#allocation3 + $0x88] sm:$0xff]
    %v28 = vld [vmem:[#allocation3] sm:$0xf]
    %v29 = vlaneseq
    %v30 = vshrl.u32 %v29, 7
    %v31 = vsub.s32 0, %v30
    %v32 = vrot.slane %v27, %v31
    %vm33 = vcmask 31744
    %v35 = vsel %vm33, %v25, 0
    %v38 = vsel %vm33, %v26, 0
    %vm40 = vcmask 1043456
    %v42 = vsel %vm40, %v28, 0
    %44 = vmatprep.subr.mxu0 0.0
    %45 = vmatpush1.msra.mxu0 %v42
    %46 = vmatprep.subr.mxu0 0.0
    %47 = vmatpush1.msra.mxu0 0.0
    %48 = vmatprep.subr.mxu0 0.0
    %49 = vmatpush1.msra.mxu0 0.0
    %50 = vmatprep.subr.mxu0 0.0
    %51 = vmatpush1.msra.mxu0 0.0
    %52 = vmatprep.subr.mxu0 0.0
    %53 = vmatpush1.msra.mxu0 0.0
    %54 = vmatprep.subr.mxu0 0.0
    %55 = vmatpush1.msra.mxu0 0.0
    %56 = vmatprep.subr.mxu0 0.0
    %57 = vmatpush1.msra.mxu0 0.0
    %58 = vmatprep.subr.mxu0 0.0
    %59 = vmatpush1.msra.mxu0 0.0
    %60 = vmatprep.subr.mxu0 0.0
    %61 = vmatpush1.msra.mxu0 0.0
    %62 = vmatprep.subr.mxu0 0.0
    %63 = vmatpush1.msra.mxu0 0.0
    %64 = vmatprep.subr.mxu0 0.0
    %65 = vmatpush1.msra.mxu0 0.0
    %66 = vmatprep.subr.mxu0 0.0
    %67 = vmatpush1.msra.mxu0 0.0
    %68 = vmatprep.subr.mxu0 0.0
    %69 = vmatpush1.msra.mxu0 0.0
    %70 = vmatprep.subr.mxu0 0.0
    %71 = vmatpush1.msra.mxu0 0.0
    %72 = vmatprep.subr.mxu0 0.0
    %73 = vmatpush1.msra.mxu0 0.0
    %74 = vmatprep.subr.mxu0 0.0
    %75 = vmatpush1.msra.mxu0 0.0
    %76 = vmatprep.subr.mxu0 0.0
    %77 = vmatpush1.msra.mxu0 0.0
    %78 = vmatprep.subr.mxu0 0.0
    %79 = vmatpush1.msra.mxu0 0.0
    %80 = vmatprep.subr.mxu0 0.0
    %81 = vmatpush1.msra.mxu0 0.0
    %82 = vmatprep.subr.mxu0 0.0
    %83 = vmatpush1.msra.mxu0 0.0
    %84 = vmatprep.subr.mxu0 0.0
    %85 = vmatpush1.msra.mxu0 0.0
    %86 = vmatprep.subr.mxu0 0.0
    %87 = vmatpush1.msra.mxu0 0.0
    %88 = vmatprep.subr.mxu0 0.0
    %89 = vmatpush1.msra.mxu0 0.0
    %90 = vmatprep.subr.mxu0 0.0
    %91 = vmatpush1.msra.mxu0 0.0
    %92 = vmatprep.subr.mxu0 0.0
    %93 = vmatpush1.msra.mxu0 0.0
    %94 = vmatprep.subr.mxu0 0.0
    %95 = vmatpush1.msra.mxu0 0.0
    %96 = vmatprep.subr.mxu0 0.0
    %97 = vmatpush1.msra.mxu0 0.0
    %98 = vmatprep.subr.mxu0 0.0
    %99 = vmatpush1.msra.mxu0 0.0
    %100 = vmatprep.subr.mxu0 0.0
    %101 = vmatpush1.msra.mxu0 0.0
    %102 = vmatprep.subr.mxu0 0.0
    %103 = vmatpush1.msra.mxu0 0.0
    %104 = vmatprep.subr.mxu0 0.0
    %105 = vmatpush1.msra.mxu0 0.0
    %106 = vmatprep.subr.mxu0 0.0
    %107 = vmatpush1.msra.mxu0 0.0
    %108 = vmatprep.mubr.f32.mxu0 0.0
    %109 = vmatmul.mubr.f32.gmra.mrb[0].mxu0 %v35
    %v110 = vpop.f32.mrb[0].mxu0
    %v111 = vadd.f32 %v32, %v110
    %v112 = vpop.f32.mrb[0].mxu0
    %113 = vmatprep.mubr.f32.mxu0 0.0
    %114 = vmatmul.mubr.f32.gmra.mrb[0].mxu0 %v38
    %v115 = vpop.f32.mrb[0].mxu0
    %v116 = vadd.f32 %v32, %v115
    %v117 = vpop.f32.mrb[0].mxu0
    %118 = vdwg.mxu0
    %v119 = vmax.f32 %v111, 0.0
    %v120 = vmax.f32 %v116, 0.0
    %v121 = vld [vmem:[#allocation3 + $0x8] sm:$0xff]
    %v122 = vld [vmem:[#allocation3 + $0x10] sm:$0xff]
    %v123 = vld [vmem:[#allocation3 + $0x18] sm:$0xff]
    %v124 = vld [vmem:[#allocation3 + $0x20] sm:$0xff]
    %v125 = vld [vmem:[#allocation3 + $0x28] sm:$0xff]
    %v126 = vld [vmem:[#allocation3 + $0x30] sm:$0xff]
    %v127 = vld [vmem:[#allocation3 + $0x38] sm:$0xff]
    %v128 = vld [vmem:[#allocation3 + $0x40] sm:$0xff]
    %v129 = vlaneseq
    %v130 = vshrl.u32 %v129, 7
    %v131 = vsub.s32 1, %v130
    %v132 = vrot.slane %v27, %v131
    %vm133 = vcmask 523264
    %v135 = vsel %vm133, %v119, 0
    %v138 = vsel %vm133, %v120, 0
    %140 = vmatprep.subr.mxu0 0.0
    %141 = vmatpush1.msra.mxu0 %v121
    %142 = vmatprep.subr.mxu0 0.0
    %143 = vmatpush1.msra.mxu0 %v122
    %144 = vmatprep.subr.mxu0 0.0
    %145 = vmatpush1.msra.mxu0 %v123
    %146 = vmatprep.subr.mxu0 0.0
    %147 = vmatpush1.msra.mxu0 %v124
    %148 = vmatprep.subr.mxu0 0.0
    %149 = vmatpush1.msra.mxu0 %v125
    %150 = vmatprep.subr.mxu0 0.0
    %151 = vmatpush1.msra.mxu0 %v126
    %152 = vmatprep.subr.mxu0 0.0
    %153 = vmatpush1.msra.mxu0 %v127
    %154 = vmatprep.subr.mxu0 0.0
    %155 = vmatpush1.msra.mxu0 %v128
    %156 = vmatprep.subr.mxu0 0.0
    %157 = vmatpush1.msra.mxu0 0.0
    %158 = vmatprep.subr.mxu0 0.0
    %159 = vmatpush1.msra.mxu0 0.0
    %160 = vmatprep.subr.mxu0 0.0
    %161 = vmatpush1.msra.mxu0 0.0
    %162 = vmatprep.subr.mxu0 0.0
    %163 = vmatpush1.msra.mxu0 0.0
    %164 = vmatprep.subr.mxu0 0.0
    %165 = vmatpush1.msra.mxu0 0.0
    %166 = vmatprep.subr.mxu0 0.0
    %167 = vmatpush1.msra.mxu0 0.0
    %168 = vmatprep.subr.mxu0 0.0
    %169 = vmatpush1.msra.mxu0 0.0
    %170 = vmatprep.subr.mxu0 0.0
    %171 = vmatpush1.msra.mxu0 0.0
    %172 = vmatprep.subr.mxu0 0.0
    %173 = vmatpush1.msra.mxu0 0.0
    %174 = vmatprep.subr.mxu0 0.0
    %175 = vmatpush1.msra.mxu0 0.0
    %176 = vmatprep.subr.mxu0 0.0
    %177 = vmatpush1.msra.mxu0 0.0
    %178 = vmatprep.subr.mxu0 0.0
    %179 = vmatpush1.msra.mxu0 0.0
    %180 = vmatprep.subr.mxu0 0.0
    %181 = vmatpush1.msra.mxu0 0.0
    %182 = vmatprep.subr.mxu0 0.0
    %183 = vmatpush1.msra.mxu0 0.0
    %184 = vmatprep.subr.mxu0 0.0
    %185 = vmatpush1.msra.mxu0 0.0
    %186 = vmatprep.subr.mxu0 0.0
    %187 = vmatpush1.msra.mxu0 0.0
    %188 = vmatprep.subr.mxu0 0.0
    %189 = vmatpush1.msra.mxu0 0.0
    %190 = vmatprep.subr.mxu0 0.0
    %191 = vmatpush1.msra.mxu0 0.0
    %192 = vmatprep.subr.mxu0 0.0
    %193 = vmatpush1.msra.mxu0 0.0
    %194 = vmatprep.subr.mxu0 0.0
    %195 = vmatpush1.msra.mxu0 0.0
    %196 = vmatprep.subr.mxu0 0.0
    %197 = vmatpush1.msra.mxu0 0.0
    %198 = vmatprep.subr.mxu0 0.0
    %199 = vmatpush1.msra.mxu0 0.0
    %200 = vmatprep.subr.mxu0 0.0
    %201 = vmatpush1.msra.mxu0 0.0
    %202 = vmatprep.subr.mxu0 0.0
    %203 = vmatpush1.msra.mxu0 0.0
    %204 = vmatprep.mubr.f32.mxu0 0.0
    %205 = vmatmul.mubr.f32.gmra.mrb[0].mxu0 %v135
    %v206 = vpop.f32.mrb[0].mxu0
    %v207 = vadd.f32 %v132, %v206
    %v208 = vpop.f32.mrb[0].mxu0
    %209 = vmatprep.mubr.f32.mxu0 0.0
    %210 = vmatmul.mubr.f32.gmra.mrb[0].mxu0 %v138
    %v211 = vpop.f32.mrb[0].mxu0
    %v212 = vadd.f32 %v132, %v211
    %v213 = vpop.f32.mrb[0].mxu0
    %214 = vdwg.mxu0
    %v215 = vmax.f32 %v207, 0.0
    %v216 = vmax.f32 %v212, 0.0
    %v217 = vld [vmem:[#allocation3 + $0x48] sm:$0xff]
    %v218 = vld [vmem:[#allocation3 + $0x50] sm:$0xff]
    %v219 = vld [vmem:[#allocation3 + $0x58] sm:$0xff]
    %v220 = vld [vmem:[#allocation3 + $0x60] sm:$0xff]
    %v221 = vld [vmem:[#allocation3 + $0x68] sm:$0xff]
    %v222 = vld [vmem:[#allocation3 + $0x70] sm:$0xff]
    %v223 = vld [vmem:[#allocation3 + $0x78] sm:$0xff]
    %v224 = vld [vmem:[#allocation3 + $0x80] sm:$0xff]
    %v225 = vlaneseq
    %v226 = vshrl.u32 %v225, 7
    %v227 = vsub.s32 2, %v226
    %v228 = vrot.slane %v27, %v227
    %v230 = vsel %vm133, %v215, 0
    %v233 = vsel %vm133, %v216, 0
    %235 = vmatprep.subr.mxu0 0.0
    %236 = vmatpush1.msra.mxu0 %v217
    %237 = vmatprep.subr.mxu0 0.0
    %238 = vmatpush1.msra.mxu0 %v218
    %239 = vmatprep.subr.mxu0 0.0
    %240 = vmatpush1.msra.mxu0 %v219
    %241 = vmatprep.subr.mxu0 0.0
    %242 = vmatpush1.msra.mxu0 %v220
    %243 = vmatprep.subr.mxu0 0.0
    %244 = vmatpush1.msra.mxu0 %v221
    %245 = vmatprep.subr.mxu0 0.0
    %246 = vmatpush1.msra.mxu0 %v222
    %247 = vmatprep.subr.mxu0 0.0
    %248 = vmatpush1.msra.mxu0 %v223
    %249 = vmatprep.subr.mxu0 0.0
    %250 = vmatpush1.msra.mxu0 %v224
    %251 = vmatprep.subr.mxu0 0.0
    %252 = vmatpush1.msra.mxu0 0.0
    %253 = vmatprep.subr.mxu0 0.0
    %254 = vmatpush1.msra.mxu0 0.0
    %255 = vmatprep.subr.mxu0 0.0
    %256 = vmatpush1.msra.mxu0 0.0
    %257 = vmatprep.subr.mxu0 0.0
    %258 = vmatpush1.msra.mxu0 0.0
    %259 = vmatprep.subr.mxu0 0.0
    %260 = vmatpush1.msra.mxu0 0.0
    %261 = vmatprep.subr.mxu0 0.0
    %262 = vmatpush1.msra.mxu0 0.0
    %263 = vmatprep.subr.mxu0 0.0
    %264 = vmatpush1.msra.mxu0 0.0
    %265 = vmatprep.subr.mxu0 0.0
    %266 = vmatpush1.msra.mxu0 0.0
    %267 = vmatprep.subr.mxu0 0.0
    %268 = vmatpush1.msra.mxu0 0.0
    %269 = vmatprep.subr.mxu0 0.0
    %270 = vmatpush1.msra.mxu0 0.0
    %271 = vmatprep.subr.mxu0 0.0
    %272 = vmatpush1.msra.mxu0 0.0
    %273 = vmatprep.subr.mxu0 0.0
    %274 = vmatpush1.msra.mxu0 0.0
    %275 = vmatprep.subr.mxu0 0.0
    %276 = vmatpush1.msra.mxu0 0.0
    %277 = vmatprep.subr.mxu0 0.0
    %278 = vmatpush1.msra.mxu0 0.0
    %279 = vmatprep.subr.mxu0 0.0
    %280 = vmatpush1.msra.mxu0 0.0
    %281 = vmatprep.subr.mxu0 0.0
    %282 = vmatpush1.msra.mxu0 0.0
    %283 = vmatprep.subr.mxu0 0.0
    %284 = vmatpush1.msra.mxu0 0.0
    %285 = vmatprep.subr.mxu0 0.0
    %286 = vmatpush1.msra.mxu0 0.0
    %287 = vmatprep.subr.mxu0 0.0
    %288 = vmatpush1.msra.mxu0 0.0
    %289 = vmatprep.subr.mxu0 0.0
    %290 = vmatpush1.msra.mxu0 0.0
    %291 = vmatprep.subr.mxu0 0.0
    %292 = vmatpush1.msra.mxu0 0.0
    %293 = vmatprep.subr.mxu0 0.0
    %294 = vmatpush1.msra.mxu0 0.0
    %295 = vmatprep.subr.mxu0 0.0
    %296 = vmatpush1.msra.mxu0 0.0
    %297 = vmatprep.subr.mxu0 0.0
    %298 = vmatpush1.msra.mxu0 0.0
    %299 = vmatprep.mubr.f32.mxu0 0.0
    %300 = vmatmul.mubr.f32.gmra.mrb[0].mxu0 %v230
    %v301 = vpop.f32.mrb[0].mxu0
    %v302 = vadd.f32 %v228, %v301
    %v303 = vpop.f32.mrb[0].mxu0
    %304 = vmatprep.mubr.f32.mxu0 0.0
    %305 = vmatmul.mubr.f32.gmra.mrb[0].mxu0 %v233
    %v306 = vpop.f32.mrb[0].mxu0
    %v307 = vadd.f32 %v228, %v306
    %v308 = vpop.f32.mrb[0].mxu0
    %309 = vdwg.mxu0
    %v310 = vmax.f32 %v302, 0.0
    %v311 = vmax.f32 %v307, 0.0
    %v315 = vunpack.c.l.s4 1983009808
    %v316 = vunpack.c.0.s8 %v315
    %v317 = vlaneseq
    %v318 = vshrl.u32 %v317, 7
    %v319 = vsub.s32 %v316, %v318
    %v320 = vrot.slane %v310, %v319
    %v322 = vunpack.c.l.s4 1983009808
    %v323 = vunpack.c.0.s8 %v322
    %v324 = vlaneseq
    %v325 = vshrl.u32 %v324, 7
    %v326 = vsub.s32 %v323, %v325
    %v327 = vrot.slane %v311, %v326
    %vm328 = vcmask 1044484
    %v329 = vsel %vm328, %v320, %v320
    %vm330 = vcmask 1046534
    %v331 = vsel %vm330, %v320, %v329
    %v332 = vrot.slane %v327, 7
    %vm333 = vcmask 1041409
    %v334 = vsel %vm333, %v332, %v331
    %vm335 = vcmask 1043459
    %v336 = vsel %vm335, %v332, %v334
    %vm337 = vcmask 1045509
    %v338 = vsel %vm337, %v332, %v336
    %vm339 = vcmask 1047559
    %v340 = vsel %vm339, %v332, %v338
    %vm342 = vcmask 517120
    %343 = vst.msk [vmem:[#allocation2] sm:$0x3] %vm342, %v340
    %v344 = vrot.slane %v320, 1
    %v345 = vsel %vm328, %v344, %v344
    %v346 = vsel %vm330, %v344, %v345
    %v347 = vsel %vm333, %v327, %v346
    %v348 = vsel %vm335, %v327, %v347
    %v349 = vsel %vm337, %v327, %v348
    %v350 = vsel %vm339, %v327, %v349
    %351 = vrot.lane.b32.xlu0 %v350, 64
    %v352 = vpop.permute.xlu0 %351
    %vm354 = vcmask 1041920
    %355 = vst.msk [vmem:[#allocation2] sm:$0x3] %vm354, %v352
    %v356 = vcombine.high %v320, %v320
    %v357 = vcombine.high %v327, %v327
    %v358 = vsel %vm328, %v356, %v356
    %v359 = vsel %vm330, %v356, %v358
    %v360 = vrot.slane %v357, 7
    %v361 = vsel %vm333, %v360, %v359
    %v362 = vsel %vm335, %v360, %v361
    %v363 = vsel %vm337, %v360, %v362
    %v364 = vsel %vm339, %v360, %v363
    %366 = vst.msk [vmem:[#allocation2 + $0x2] sm:$0x3] %vm342, %v364
    %v367 = vrot.slane %v356, 1
    %v368 = vsel %vm328, %v367, %v367
    %v369 = vsel %vm330, %v367, %v368
    %v370 = vsel %vm333, %v357, %v369
    %v371 = vsel %vm335, %v357, %v370
    %v372 = vsel %vm337, %v357, %v371
    %v373 = vsel %vm339, %v357, %v372
    %374 = vrot.lane.b32.xlu0 %v373, 64
    %v375 = vpop.permute.xlu0 %374
    %377 = vst.msk [vmem:[#allocation2 + $0x2] sm:$0x3] %vm354, %v375
    %v378 = vcombine.high %v310, %v310
    %v380 = vunpack.c.l.s4 1983009808
    %v381 = vunpack.c.0.s8 %v380
    %v382 = vlaneseq
    %v383 = vshrl.u32 %v382, 7
    %v384 = vsub.s32 %v381, %v383
    %v385 = vrot.slane %v378, %v384
    %v386 = vcombine.high %v311, %v311
    %v388 = vunpack.c.l.s4 1983009808
    %v389 = vunpack.c.0.s8 %v388
    %v390 = vlaneseq
    %v391 = vshrl.u32 %v390, 7
    %v392 = vsub.s32 %v389, %v391
    %v393 = vrot.slane %v386, %v392
    %v394 = vsel %vm328, %v385, %v385
    %v395 = vsel %vm330, %v385, %v394
    %v396 = vrot.slane %v393, 7
    %v397 = vsel %vm333, %v396, %v395
    %v398 = vsel %vm335, %v396, %v397
    %v399 = vsel %vm337, %v396, %v398
    %v400 = vsel %vm339, %v396, %v399
    %402 = vst.msk [vmem:[#allocation2 + $0x4] sm:$0x3] %vm342, %v400
    %v403 = vrot.slane %v385, 1
    %v404 = vsel %vm328, %v403, %v403
    %v405 = vsel %vm330, %v403, %v404
    %v406 = vsel %vm333, %v393, %v405
    %v407 = vsel %vm335, %v393, %v406
    %v408 = vsel %vm337, %v393, %v407
    %v409 = vsel %vm339, %v393, %v408
    %410 = vrot.lane.b32.xlu0 %v409, 64
    %v411 = vpop.permute.xlu0 %410
    %413 = vst.msk [vmem:[#allocation2 + $0x4] sm:$0x3] %vm354, %v411
    %v414 = vcombine.high %v385, %v385
    %v415 = vcombine.high %v393, %v393
    %v416 = vsel %vm328, %v414, %v414
    %v417 = vsel %vm330, %v414, %v416
    %v418 = vrot.slane %v415, 7
    %v419 = vsel %vm333, %v418, %v417
    %v420 = vsel %vm335, %v418, %v419
    %v421 = vsel %vm337, %v418, %v420
    %v422 = vsel %vm339, %v418, %v421
    %424 = vst.msk [vmem:[#allocation2 + $0x6] sm:$0x3] %vm342, %v422
    %v425 = vrot.slane %v414, 1
    %v426 = vsel %vm328, %v425, %v425
    %v427 = vsel %vm330, %v425, %v426
    %v428 = vsel %vm333, %v415, %v427
    %v429 = vsel %vm335, %v415, %v428
    %v430 = vsel %vm337, %v415, %v429
    %v431 = vsel %vm339, %v415, %v430
    %432 = vrot.lane.b32.xlu0 %v431, 64
    %v433 = vpop.permute.xlu0 %432
    %435 = vst.msk [vmem:[#allocation2 + $0x6] sm:$0x3] %vm354, %v433
    %v436 = vld [vmem:[#allocation3 + $0x90] sm:$0xff]
    %v437 = vld [vmem:[#allocation3 + $0x98] sm:$0xff]
    %v438 = vld [vmem:[#allocation3 + $0xa0] sm:$0xff]
    %v439 = vld [vmem:[#allocation3 + $0xa8] sm:$0xff]
    %v440 = vld [vmem:[#allocation3 + $0xb0] sm:$0xff]
    %v441 = vld [vmem:[#allocation3 + $0xb8] sm:$0xff]
    %v442 = vld [vmem:[#allocation3 + $0xc0] sm:$0xff]
    %v443 = vld [vmem:[#allocation3 + $0xc8] sm:$0xff]
    %v444 = vld [vmem:[#allocation3 + $0xd0] sm:$0xff]
    %v445 = vld [vmem:[#allocation3 + $0xd8] sm:$0xff]
    %v446 = vld [vmem:[#allocation3 + $0xe0] sm:$0xff]
    %v447 = vld [vmem:[#allocation3 + $0xe8] sm:$0xff]
    %v448 = vld [vmem:[#allocation3 + $0xf0] sm:$0xff]
    %v449 = vld [vmem:[#allocation3 + $0xf8] sm:$0xff]
    %v450 = vld [vmem:[#allocation3 + $0x100] sm:$0xff]
    %v451 = vld [vmem:[#allocation3 + $0x108] sm:$0xff]
    %v452 = vld [vmem:[#allocation3 + $0x110] sm:$0xff]
    %v453 = vld [vmem:[#allocation3 + $0x118] sm:$0xff]
    %v454 = vld [vmem:[#allocation3 + $0x120] sm:$0xff]
    %v455 = vld [vmem:[#allocation3 + $0x128] sm:$0xff]
    %v456 = vld [vmem:[#allocation3 + $0x130] sm:$0xff]
    %v457 = vld [vmem:[#allocation3 + $0x138] sm:$0xff]
    %v458 = vld [vmem:[#allocation3 + $0x140] sm:$0xff]
    %v459 = vld [vmem:[#allocation3 + $0x148] sm:$0xff]
    %v460 = vld [vmem:[#allocation3 + $0x150] sm:$0xff]
    %v461 = vld [vmem:[#allocation3 + $0x158] sm:$0xff]
    %v462 = vld [vmem:[#allocation3 + $0x160] sm:$0xff]
    %v463 = vld [vmem:[#allocation3 + $0x168] sm:$0xff]
    %v464 = vld [vmem:[#allocation3 + $0x170] sm:$0xff]
    %v465 = vld [vmem:[#allocation3 + $0x178] sm:$0xff]
    %v466 = vld [vmem:[#allocation3 + $0x180] sm:$0xff]
    %v467 = vld [vmem:[#allocation3 + $0x188] sm:$0xff]
    %v468 = vld [vmem:[#allocation3 + $0x190] sm:$0xff]
    %v469 = vld [vmem:[#allocation3 + $0x198] sm:$0xff]
    %v470 = vld [vmem:[#allocation3 + $0x1a0] sm:$0xff]
    %v471 = vld [vmem:[#allocation3 + $0x1a8] sm:$0xff]
    %v472 = vld [vmem:[#allocation3 + $0x1b0] sm:$0xff]
    %v473 = vld [vmem:[#allocation3 + $0x1b8] sm:$0xff]
    %v474 = vld [vmem:[#allocation3 + $0x1c0] sm:$0xff]
    %v475 = vld [vmem:[#allocation3 + $0x1c8] sm:$0xff]
    %v476 = vld [vmem:[#allocation3 + $0x1d0] sm:$0xff]
    %v477 = vld [vmem:[#allocation3 + $0x1d8] sm:$0xff]
    %v478 = vld [vmem:[#allocation3 + $0x1e0] sm:$0xff]
    %v479 = vld [vmem:[#allocation3 + $0x1e8] sm:$0xff]
    %v480 = vld [vmem:[#allocation3 + $0x1f0] sm:$0xff]
    %v481 = vld [vmem:[#allocation3 + $0x1f8] sm:$0xff]
    %v482 = vld [vmem:[#allocation3 + $0x200] sm:$0xff]
    %v483 = vld [vmem:[#allocation3 + $0x208] sm:$0xff]
    %v484 = vld [vmem:[#allocation3 + $0x210] sm:$0xff]
    %v485 = vld [vmem:[#allocation3 + $0x218] sm:$0xff]
    %v486 = vld [vmem:[#allocation3 + $0x220] sm:$0xff]
    %v487 = vld [vmem:[#allocation3 + $0x228] sm:$0xff]
    %v488 = vld [vmem:[#allocation3 + $0x230] sm:$0xff]
    %v489 = vld [vmem:[#allocation3 + $0x238] sm:$0xff]
    %v490 = vld [vmem:[#allocation3 + $0x240] sm:$0xff]
    %v491 = vld [vmem:[#allocation3 + $0x248] sm:$0xff]
    %v492 = vld [vmem:[#allocation3 + $0x250] sm:$0xff]
    %v493 = vld [vmem:[#allocation3 + $0x258] sm:$0xff]
    %v494 = vld [vmem:[#allocation3 + $0x260] sm:$0xff]
    %v495 = vld [vmem:[#allocation3 + $0x268] sm:$0xff]
    %v496 = vld [vmem:[#allocation3 + $0x270] sm:$0xff]
    %v497 = vld [vmem:[#allocation3 + $0x278] sm:$0xff]
    %v498 = vld [vmem:[#allocation3 + $0x280] sm:$0xff]
    %v499 = vld [vmem:[#allocation3 + $0x288] sm:$0xff]
    %v500 = vld [vmem:[#allocation2] sm:$0xff]
    %v501 = vld [vmem:[#allocation3 + $0x290] sm:$0xff]
    %v502 = vlaneseq
    %v503 = vshrl.u32 %v502, 7
    %v504 = vsub.s32 0, %v503
    %v505 = vrot.slane %v501, %v504
    %v507 = vcombine.high %v500, %v500
    %v509 = vunpack.c.l.s4 1983009808
    %v510 = vunpack.c.0.s8 %v509
    %v511 = vlaneseq
    %v512 = vshrl.u32 %v511, 7
    %v513 = vsub.s32 %v510, %v512
    %v514 = vrot.slane %v500, %v513
    %v516 = vunpack.c.l.s4 1983009808
    %v517 = vunpack.c.0.s8 %v516
    %v518 = vlaneseq
    %v519 = vshrl.u32 %v518, 7
    %v520 = vsub.s32 %v517, %v519
    %v521 = vrot.slane %v507, %v520
    %v522 = vcombine.high %v514, %v514
    %v523 = vcombine.high %v521, %v521
    %528 = vmatprep.subr.mxu0 0.0
    %529 = vmatpush1.msra.mxu0 %v436
    %530 = vmatprep.subr.mxu0 0.0
    %531 = vmatpush1.msra.mxu0 %v437
    %532 = vmatprep.subr.mxu0 0.0
    %533 = vmatpush1.msra.mxu0 %v438
    %534 = vmatprep.subr.mxu0 0.0
    %535 = vmatpush1.msra.mxu0 %v439
    %536 = vmatprep.subr.mxu0 0.0
    %537 = vmatpush1.msra.mxu0 %v440
    %538 = vmatprep.subr.mxu0 0.0
    %539 = vmatpush1.msra.mxu0 %v441
    %540 = vmatprep.subr.mxu0 0.0
    %541 = vmatpush1.msra.mxu0 %v442
    %542 = vmatprep.subr.mxu0 0.0
    %543 = vmatpush1.msra.mxu0 %v443
    %544 = vmatprep.subr.mxu0 0.0
    %545 = vmatpush1.msra.mxu0 %v444
    %546 = vmatprep.subr.mxu0 0.0
    %547 = vmatpush1.msra.mxu0 %v445
    %548 = vmatprep.subr.mxu0 0.0
    %549 = vmatpush1.msra.mxu0 %v446
    %550 = vmatprep.subr.mxu0 0.0
    %551 = vmatpush1.msra.mxu0 %v447
    %552 = vmatprep.subr.mxu0 0.0
    %553 = vmatpush1.msra.mxu0 %v448
    %554 = vmatprep.subr.mxu0 0.0
    %555 = vmatpush1.msra.mxu0 %v449
    %556 = vmatprep.subr.mxu0 0.0
    %557 = vmatpush1.msra.mxu0 %v450
    %558 = vmatprep.subr.mxu0 0.0
    %559 = vmatpush1.msra.mxu0 %v451
    %560 = vmatprep.subr.mxu0 0.0
    %561 = vmatpush1.msra.mxu0 %v452
    %562 = vmatprep.subr.mxu0 0.0
    %563 = vmatpush1.msra.mxu0 %v453
    %564 = vmatprep.subr.mxu0 0.0
    %565 = vmatpush1.msra.mxu0 %v454
    %566 = vmatprep.subr.mxu0 0.0
    %567 = vmatpush1.msra.mxu0 %v455
    %568 = vmatprep.subr.mxu0 0.0
    %569 = vmatpush1.msra.mxu0 %v456
    %570 = vmatprep.subr.mxu0 0.0
    %571 = vmatpush1.msra.mxu0 %v457
    %572 = vmatprep.subr.mxu0 0.0
    %573 = vmatpush1.msra.mxu0 %v458
    %574 = vmatprep.subr.mxu0 0.0
    %575 = vmatpush1.msra.mxu0 %v459
    %576 = vmatprep.subr.mxu0 0.0
    %577 = vmatpush1.msra.mxu0 %v460
    %578 = vmatprep.subr.mxu0 0.0
    %579 = vmatpush1.msra.mxu0 %v461
    %580 = vmatprep.subr.mxu0 0.0
    %581 = vmatpush1.msra.mxu0 %v462
    %582 = vmatprep.subr.mxu0 0.0
    %583 = vmatpush1.msra.mxu0 %v463
    %584 = vmatprep.subr.mxu0 0.0
    %585 = vmatpush1.msra.mxu0 %v464
    %586 = vmatprep.subr.mxu0 0.0
    %587 = vmatpush1.msra.mxu0 %v465
    %588 = vmatprep.subr.mxu0 0.0
    %589 = vmatpush1.msra.mxu0 %v466
    %590 = vmatprep.subr.mxu0 0.0
    %591 = vmatpush1.msra.mxu0 %v467
    %592 = vmatprep.mubr.f32.mxu0 %v522
    %593 = vmatmul.mubr.f32.gmra.mrb[0].mxu0 %v514
    %v594 = vpop.f32.mrb[0].mxu0
    %v595 = vadd.f32 %v505, %v594
    %v596 = vpop.f32.mrb[0].mxu0
    %597 = vdwg.mxu0
    %598 = vmatprep.subr.mxu0 0.0
    %599 = vmatpush1.msra.mxu0 %v468
    %600 = vmatprep.subr.mxu0 0.0
    %601 = vmatpush1.msra.mxu0 %v469
    %602 = vmatprep.subr.mxu0 0.0
    %603 = vmatpush1.msra.mxu0 %v470
    %604 = vmatprep.subr.mxu0 0.0
    %605 = vmatpush1.msra.mxu0 %v471
    %606 = vmatprep.subr.mxu0 0.0
    %607 = vmatpush1.msra.mxu0 %v472
    %608 = vmatprep.subr.mxu0 0.0
    %609 = vmatpush1.msra.mxu0 %v473
    %610 = vmatprep.subr.mxu0 0.0
    %611 = vmatpush1.msra.mxu0 %v474
    %612 = vmatprep.subr.mxu0 0.0
    %613 = vmatpush1.msra.mxu0 %v475
    %614 = vmatprep.subr.mxu0 0.0
    %615 = vmatpush1.msra.mxu0 %v476
    %616 = vmatprep.subr.mxu0 0.0
    %617 = vmatpush1.msra.mxu0 %v477
    %618 = vmatprep.subr.mxu0 0.0
    %619 = vmatpush1.msra.mxu0 %v478
    %620 = vmatprep.subr.mxu0 0.0
    %621 = vmatpush1.msra.mxu0 %v479
    %622 = vmatprep.subr.mxu0 0.0
    %623 = vmatpush1.msra.mxu0 %v480
    %624 = vmatprep.subr.mxu0 0.0
    %625 = vmatpush1.msra.mxu0 %v481
    %626 = vmatprep.subr.mxu0 0.0
    %627 = vmatpush1.msra.mxu0 %v482
    %628 = vmatprep.subr.mxu0 0.0
    %629 = vmatpush1.msra.mxu0 %v483
    %630 = vmatprep.subr.mxu0 0.0
    %631 = vmatpush1.msra.mxu0 %v484
    %632 = vmatprep.subr.mxu0 0.0
    %633 = vmatpush1.msra.mxu0 %v485
    %634 = vmatprep.subr.mxu0 0.0
    %635 = vmatpush1.msra.mxu0 %v486
    %636 = vmatprep.subr.mxu0 0.0
    %637 = vmatpush1.msra.mxu0 %v487
    %638 = vmatprep.subr.mxu0 0.0
    %639 = vmatpush1.msra.mxu0 %v488
    %640 = vmatprep.subr.mxu0 0.0
    %641 = vmatpush1.msra.mxu0 %v489
    %642 = vmatprep.subr.mxu0 0.0
    %643 = vmatpush1.msra.mxu0 %v490
    %644 = vmatprep.subr.mxu0 0.0
    %645 = vmatpush1.msra.mxu0 %v491
    %646 = vmatprep.subr.mxu0 0.0
    %647 = vmatpush1.msra.mxu0 %v492
    %648 = vmatprep.subr.mxu0 0.0
    %649 = vmatpush1.msra.mxu0 %v493
    %650 = vmatprep.subr.mxu0 0.0
    %651 = vmatpush1.msra.mxu0 %v494
    %652 = vmatprep.subr.mxu0 0.0
    %653 = vmatpush1.msra.mxu0 %v495
    %654 = vmatprep.subr.mxu0 0.0
    %655 = vmatpush1.msra.mxu0 %v496
    %656 = vmatprep.subr.mxu0 0.0
    %657 = vmatpush1.msra.mxu0 %v497
    %658 = vmatprep.subr.mxu0 0.0
    %659 = vmatpush1.msra.mxu0 %v498
    %660 = vmatprep.subr.mxu0 0.0
    %661 = vmatpush1.msra.mxu0 %v499
    %662 = vmatprep.mubr.f32.mxu0 %v523
    %663 = vmatmul.mubr.f32.gmra.mrb[0].mxu0 %v521
    %v664 = vpop.f32.mrb[0].mxu0
    %v665 = vadd.f32 %v595, %v664
    %v666 = vpop.f32.mrb[0].mxu0
    %667 = vdwg.mxu0
    %v668 = vmax.f32 %v665, 0.0
    %v669 = vlaneseq
    %v670 = vshrl.u32 %v669, 7
    %v671 = vsub.s32 1, %v670
    %v672 = vrot.slane %v501, %v671
    %v673 = vmul.f32 %v668, %v672
    %vm674 = vcmask 1041408
    %v675 = vsel %vm674, %v673, 0.0
    %676 = vadd.xlane.f32.xlu0 %v675
    %v677 = vpop.xlane.xlu0 %676
    %v678 = vlaneseq
    %v679 = vshrl.u32 %v678, 7
    %v680 = vsub.s32 2, %v679
    %v681 = vrot.slane %v501, %v680
    %v682 = vadd.f32 %v677, %v681
    %vm683 = vcmask 1024
    %684 = vst.msk [vmem:[%s2] sm:$0x3] %vm683, %v682
    // Predicated region
    $region14: #{cnn_forward.1} parent=1 // pred_check
      _
    $region15: #{cnn_forward.1} parent=1 // pred_check_branch
      %686 = sbr.rel (0) target = $region17
    $region16: #{cnn_forward.1} parent=1 // pred_region
      _
    $region17: #{cnn_forward.1} parent=1 // pred_fallthru
      _
    // Predicated region
    $region18: #{cnn_forward.1} parent=1 // pred_check
      _
    $region19: #{cnn_forward.1} parent=1 // pred_check_branch
      %688 = sbr.rel (0) target = $region21
    $region20: #{cnn_forward.1} parent=1 // pred_region
      _
    $region21: #{cnn_forward.1} parent=1 // pred_fallthru
      _
    %689 = vsyncpa [#allocation4], 1

</llo_original>
